<compile_context>
chip_gen: v7x
topology: tpu7x:2x2x1
jax: 0.10.0
libtpu: 0.0.40
codegen_flags: <defaults>
</compile_context>

<pallas_src>
import functools

import jax
import jax.numpy as jnp
from jax.experimental import pallas as pl
from jax.experimental.pallas import tpu as pltpu


def _label_smoothing_kernel(pred_ref, tgt_ref, out_ref, acc_ref, *,
                            smoothing: float, n_valid: int):
    # pred_ref: (TILE_N, C) float block           (one row-tile per grid step)
    # tgt_ref : (TILE_N, 1) int32 block
    # out_ref : (1, 1) float32 output (mean loss) -- constant index_map, written once
    # acc_ref : (1, 1) float32 VMEM scratch accumulator
    step = pl.program_id(0)

    @pl.when(step == 0)
    def _():
        acc_ref[...] = jnp.zeros_like(acc_ref)

    pred = pred_ref[...].astype(jnp.float32)              # upcast in-kernel (bf16 ok)
    tgt = tgt_ref[...]                                    # (TILE_N, 1) int32
    tile_n, c = pred.shape

    # Numerically stable log-softmax pieces (no full log_prob materialization).
    m = jnp.max(pred, axis=1, keepdims=True)              # (TILE_N, 1)
    shifted = pred - m                                    # (TILE_N, C)
    lse = jnp.log(jnp.sum(jnp.exp(shifted), axis=1, keepdims=True))  # (TILE_N, 1)

    # Pick shifted[i, tgt_i] via one iota==tgt compare + where + row-sum.
    class_ids = jax.lax.broadcasted_iota(jnp.int32, (tile_n, c), 1)
    tgt_shift = jnp.sum(jnp.where(class_ids == tgt, shifted, 0.0),
                        axis=1, keepdims=True)            # (TILE_N, 1)
    sum_shift = jnp.sum(shifted, axis=1, keepdims=True)   # (TILE_N, 1)

    # loss_i = -sum_j smooth_one_hot[i,j] * log_prob[i,j], rewritten algebraically.
    per_row = ((1.0 - smoothing) * (lse - tgt_shift)
               + (smoothing / c) * (c * lse - sum_shift))  # (TILE_N, 1)

    # Mask rows that are padding (N rounded up to a multiple of TILE_N).
    row_ids = step * tile_n + jax.lax.broadcasted_iota(jnp.int32, (tile_n, 1), 0)
    per_row = jnp.where(row_ids < n_valid, per_row, 0.0)

    acc_ref[...] += jnp.sum(per_row)

    @pl.when(step == pl.num_programs(0) - 1)
    def _():
        # reduction='mean': divide by the TRUE number of rows, not the padded count.
        out_ref[...] = acc_ref[...] / jnp.float32(n_valid)


def _choose_tile_n(n, c, itemsize, target_bytes=4 * 1024 * 1024):
    """Pick a row tile: multiple of 8, <= 1024 rows, pred tile ~<= target_bytes."""
    tile = target_bytes // max(1, c * itemsize)
    tile = max(8, min(1024, (tile // 8) * 8))
    n_ceil8 = ((n + 7) // 8) * 8
    return min(tile, n_ceil8)


def label_smoothing_loss(pred, target, smoothing=0.1, tile_n=None):
    """pred: (N, C) float (f32 or bf16); target: (N,) int. Returns scalar mean loss."""
    n, c = pred.shape
    itemsize = jnp.dtype(pred.dtype).itemsize
    if tile_n is None:
        tile_n = _choose_tile_n(n, c, itemsize)
    n_pad = pl.cdiv(n, tile_n) * tile_n

    tgt2d = target.astype(jnp.int32).reshape(n, 1)
    if n_pad != n:
        pred = jnp.pad(pred, ((0, n_pad - n), (0, 0)))
        tgt2d = jnp.pad(tgt2d, ((0, n_pad - n), (0, 0)))

    kernel = functools.partial(_label_smoothing_kernel,
                               smoothing=float(smoothing), n_valid=n)

    out = pl.pallas_call(
        kernel,
        out_shape=jax.ShapeDtypeStruct((1, 1), jnp.float32),
        grid_spec=pltpu.PrefetchScalarGridSpec(
            num_scalar_prefetch=0,
            grid=(n_pad // tile_n,),
            in_specs=[
                pl.BlockSpec((tile_n, c), lambda i: (i, 0)),
                pl.BlockSpec((tile_n, 1), lambda i: (i, 0)),
            ],
            out_specs=pl.BlockSpec((1, 1), lambda i: (0, 0)),
            scratch_shapes=[pltpu.VMEM((1, 1), jnp.float32)],
        ),
        compiler_params=pltpu.CompilerParams(
            dimension_semantics=("arbitrary",),   # reduction axis
        ),
    )(pred, tgt2d)
    return out[0, 0]


def _reference(pred, target, smoothing=0.1):
    # Pure-JAX reference of the PyTorch forward (reduction='mean').
    n, c = pred.shape
    one_hot = jax.nn.one_hot(target, c, dtype=jnp.float32)
    smooth = one_hot * (1.0 - smoothing) + smoothing / c
    log_prob = jax.nn.log_softmax(pred.astype(jnp.float32), axis=1)
    loss = jnp.sum(-smooth * log_prob, axis=1)
    return jnp.mean(loss)


if __name__ == "__main__":
    key = jax.random.PRNGKey(0)
    k1, k2, k3, k4 = jax.random.split(key, 4)

    # Test 1: small f32 case (single-tile path).
    N, C = 8, 32
    pred = jax.random.normal(k1, (N, C), dtype=jnp.float32)
    target = jax.random.randint(k2, (N,), 0, C, dtype=jnp.int32)
    loss = jax.block_until_ready(label_smoothing_loss(pred, target, smoothing=0.1))
    ref = _reference(pred, target, smoothing=0.1)
    assert jnp.allclose(loss, ref, atol=1e-5, rtol=1e-5), (loss, ref)

    # Test 2: multi-step grid with remainder masking (N=20 padded to 24, tile_n=8)
    # and bf16 logits (upcast happens inside the kernel).
    N2, C2 = 20, 128
    pred2 = jax.random.normal(k3, (N2, C2), dtype=jnp.float32).astype(jnp.bfloat16)
    target2 = jax.random.randint(k4, (N2,), 0, C2, dtype=jnp.int32)
    loss2 = jax.block_until_ready(
        label_smoothing_loss(pred2, target2, smoothing=0.1, tile_n=8))
    ref2 = _reference(pred2.astype(jnp.float32), target2, smoothing=0.1)
    assert jnp.allclose(loss2, ref2, atol=1e-4, rtol=1e-4), (loss2, ref2)

    print("KERNEL_OK")
</pallas_src>

<mosaic_0001>
module attributes {stable_mosaic.version = 11 : i64} {
  func.func @_label_smoothing_kernel(%arg0: i32, %arg1: memref<8x32xf32, #tpu.memory_space<vmem>>, %arg2: memref<8x1xi32, #tpu.memory_space<vmem>>, %arg3: memref<1x1xf32, #tpu.memory_space<vmem>>, %arg4: memref<1x1xf32, #tpu.memory_space<vmem>>) attributes {dimension_semantics = [#tpu.dimension_semantics<arbitrary>], iteration_bounds = array<i64: 1>, scalar_prefetch = 0 : i64, scratch_operands = 1 : i64, tpu.core_type = #tpu.core_type<tc>, window_params = [{transform_indices = @transform_0, window_bounds = array<i64: 8, 32>}, {transform_indices = @transform_1, window_bounds = array<i64: 8, 1>}, {pipeline_mode = #tpu.pipeline_mode<synchronous>, transform_indices = @transform_2, window_bounds = array<i64: 1, 1>}]} {
    %c0_i32 = arith.constant 0 : i32
    %0 = arith.cmpi eq, %arg0, %c0_i32 : i32
    %1 = arith.extui %0 : i1 to i32
    %c0_i32_0 = arith.constant 0 : i32
    %2 = arith.cmpi ne, %1, %c0_i32_0 : i32
    scf.if %2 {
      %cst_20 = arith.constant 0.000000e+00 : f32
      %50 = vector.broadcast %cst_20 : f32 to vector<1x1xf32>
      %c0_21 = arith.constant 0 : index
      %c0_22 = arith.constant 0 : index
      %51 = vector.load %arg4[%c0_21, %c0_22] : memref<1x1xf32, #tpu.memory_space<vmem>>, vector<1x1xf32>
      tpu.vector_store %arg4[%c0_21, %c0_22], %50 {strides = array<i32>} : memref<1x1xf32, #tpu.memory_space<vmem>>, vector<1x1xf32>,
    } else {
    }
    %c0 = arith.constant 0 : index
    %c0_1 = arith.constant 0 : index
    %3 = vector.load %arg1[%c0, %c0_1] : memref<8x32xf32, #tpu.memory_space<vmem>>, vector<8x32xf32>
    %c0_2 = arith.constant 0 : index
    %c0_3 = arith.constant 0 : index
    %4 = vector.load %arg2[%c0_2, %c0_3] : memref<8x1xi32, #tpu.memory_space<vmem>>, vector<8x1xi32>
    %cst = arith.constant dense<0xFF800000> : vector<8xf32>
    %5 = vector.multi_reduction <maximumf>, %3, %cst [1] : vector<8x32xf32> to vector<8xf32>
    %6 = vector.shape_cast %5 : vector<8xf32> to vector<8x1xf32>
    %7 = vector.broadcast %6 : vector<8x1xf32> to vector<8x32xf32>
    %8 = arith.subf %3, %7 : vector<8x32xf32>
    %9 = math.exp %8 : vector<8x32xf32>
    %cst_4 = arith.constant dense<0.000000e+00> : vector<8xf32>
    %10 = vector.multi_reduction <add>, %9, %cst_4 [1] : vector<8x32xf32> to vector<8xf32>
    %11 = vector.shape_cast %10 : vector<8xf32> to vector<8x1xf32>
    %12 = math.log %11 : vector<8x1xf32>
    %13 = tpu.iota {dimensions = array<i32: 1>} : vector<8x32xi32>
    %14 = vector.broadcast %4 : vector<8x1xi32> to vector<8x32xi32>
    %15 = arith.cmpi eq, %13, %14 : vector<8x32xi32>
    %cst_5 = arith.constant 0.000000e+00 : f32
    %16 = vector.broadcast %cst_5 : f32 to vector<8x32xf32>
    %17 = arith.select %15, %8, %16 : vector<8x32xi1>, vector<8x32xf32>
    %cst_6 = arith.constant dense<0.000000e+00> : vector<8xf32>
    %18 = vector.multi_reduction <add>, %17, %cst_6 [1] : vector<8x32xf32> to vector<8xf32>
    %19 = vector.shape_cast %18 : vector<8xf32> to vector<8x1xf32>
    %cst_7 = arith.constant dense<0.000000e+00> : vector<8xf32>
    %20 = vector.multi_reduction <add>, %8, %cst_7 [1] : vector<8x32xf32> to vector<8xf32>
    %21 = vector.shape_cast %20 : vector<8xf32> to vector<8x1xf32>
    %22 = arith.subf %12, %19 : vector<8x1xf32>
    %cst_8 = arith.constant 0.899999976 : f32
    %23 = vector.broadcast %cst_8 : f32 to vector<8x1xf32>
    %24 = arith.mulf %23, %22 : vector<8x1xf32>
    %cst_9 = arith.constant 3.200000e+01 : f32
    %25 = vector.broadcast %cst_9 : f32 to vector<8x1xf32>
    %26 = arith.mulf %25, %12 : vector<8x1xf32>
    %27 = arith.subf %26, %21 : vector<8x1xf32>
    %cst_10 = arith.constant 3.125000e-03 : f32
    %28 = vector.broadcast %cst_10 : f32 to vector<8x1xf32>
    %29 = arith.mulf %28, %27 : vector<8x1xf32>
    %30 = arith.addf %24, %29 : vector<8x1xf32>
    %c8_i32 = arith.constant 8 : i32
    %31 = arith.muli %arg0, %c8_i32 : i32
    %32 = tpu.iota {dimensions = array<i32: 0>} : vector<8x1xi32>
    %33 = vector.broadcast %31 : i32 to vector<8x1xi32>
    %34 = arith.addi %33, %32 : vector<8x1xi32>
    %c8_i32_11 = arith.constant 8 : i32
    %35 = vector.broadcast %c8_i32_11 : i32 to vector<8x1xi32>
    %36 = arith.cmpi slt, %34, %35 : vector<8x1xi32>
    %cst_12 = arith.constant 0.000000e+00 : f32
    %37 = vector.broadcast %cst_12 : f32 to vector<8x1xf32>
    %38 = arith.select %36, %30, %37 : vector<8x1xi1>, vector<8x1xf32>
    %c0_13 = arith.constant 0 : index
    %c0_14 = arith.constant 0 : index
    %39 = vector.load %arg4[%c0_13, %c0_14] : memref<1x1xf32, #tpu.memory_space<vmem>>, vector<1x1xf32>
    %40 = vector.shape_cast %38 : vector<8x1xf32> to vector<1x8x1xf32>
    %cst_15 = arith.constant dense<0.000000e+00> : vector<1xf32>
    %41 = vector.multi_reduction <add>, %40, %cst_15 [1, 2] : vector<1x8x1xf32> to vector<1xf32>
    %42 = vector.shape_cast %41 : vector<1xf32> to vector<1x1x1xf32>
    %43 = vector.extract %42[0, 0, 0] : f32 from vector<1x1x1xf32>
    %44 = vector.broadcast %43 : f32 to vector<1x1xf32>
    %45 = arith.addf %39, %44 : vector<1x1xf32>
    %c0_16 = arith.constant 0 : index
    %c0_17 = arith.constant 0 : index
    %46 = vector.load %arg4[%c0_16, %c0_17] : memref<1x1xf32, #tpu.memory_space<vmem>>, vector<1x1xf32>
    tpu.vector_store %arg4[%c0_16, %c0_17], %45 {strides = array<i32>} : memref<1x1xf32, #tpu.memory_space<vmem>>, vector<1x1xf32>,
    %c0_i32_18 = arith.constant 0 : i32
    %47 = arith.cmpi eq, %arg0, %c0_i32_18 : i32
    %48 = arith.extui %47 : i1 to i32
    %c0_i32_19 = arith.constant 0 : i32
    %49 = arith.cmpi ne, %48, %c0_i32_19 : i32
    scf.if %49 {
      %c0_20 = arith.constant 0 : index
      %c0_21 = arith.constant 0 : index
      %50 = vector.load %arg4[%c0_20, %c0_21] : memref<1x1xf32, #tpu.memory_space<vmem>>, vector<1x1xf32>
      %cst_22 = arith.constant 8.000000e+00 : f32
      %51 = vector.broadcast %cst_22 : f32 to vector<1x1xf32>
      %52 = arith.divf %50, %51 : vector<1x1xf32>
      %c0_23 = arith.constant 0 : index
      %c0_24 = arith.constant 0 : index
      %53 = vector.load %arg3[%c0_23, %c0_24] : memref<1x1xf32, #tpu.memory_space<vmem>>, vector<1x1xf32>
      tpu.vector_store %arg3[%c0_23, %c0_24], %52 {strides = array<i32>} : memref<1x1xf32, #tpu.memory_space<vmem>>, vector<1x1xf32>,
    } else {
    }
    return
  }
  func.func @transform_0(%arg0: i32) -> (i32, i32) {
    %c0_i32 = arith.constant 0 : i32
    %c0_i32_0 = arith.constant 0 : i32
    return %arg0, %c0_i32 : i32, i32
  }
  func.func @transform_1(%arg0: i32) -> (i32, i32) {
    %c0_i32 = arith.constant 0 : i32
    %c0_i32_0 = arith.constant 0 : i32
    return %arg0, %c0_i32 : i32, i32
  }
  func.func @transform_2(%arg0: i32) -> (i32, i32) {
    %c0_i32 = arith.constant 0 : i32
    %c0_i32_0 = arith.constant 0 : i32
    %c0_i32_1 = arith.constant 0 : i32
    return %c0_i32, %c0_i32_0 : i32, i32
  }
}

</mosaic_0001>

<llo_original>
// kernel: tpu_custom_call.1
$region0: #{tpu_custom_call.1}
  #allocation0 [shape = 'u32[]', space=smem, size = 0x4, offset = 0x4, fixed_abs, tag = 'smem constant byte address 0x4 - core index']
  #allocation1 [shape = 'u32[144,128]{1,0:T(1,128)}', space=vmem, size = 0x12000, scoped, tag = 'internal scratch']
  #allocation2 [shape = 'f32[1,1]{1,0:T(1,128)}', space=vmem, size = 0x200, scoped, tag = 'scratch operand']
  %s0 = inlined_call_operand.vmem [shape: f32[8,32], index: 0, kind: input, shape index: {}]
  %s1 = inlined_call_operand.vmem [shape: s32[8,1], index: 1, kind: input, shape index: {}]
  %s2 = inlined_call_operand.hbm [shape: f32[1,1], index: 2, kind: output, shape index: {}]
  %s3 = sld [smem:[#allocation0]]
  $region26: #{tpu_custom_call.1} parent=0
    _
  %s5 = ssub.s32 1, %s3
  %s6 = scalar_select 0, %s5, %s3
  $region1: #{tpu_custom_call.1} parent=0
    #allocation3 [shape = 'u8[512]{0}', space=vmem, size = 0x400, scoped, tag = 'output window, operand 0, single buffered']
    #allocation4 [shape = 's32[1]{0}', space=sflag, size = 0x4, scoped, tag = 'scoped memory for tpu_custom_call.1']
    %7 = vsyncpa [#allocation4], 0
    // Predicated region
    $region2: #{tpu_custom_call.1} parent=1 // pred_check
      _
    $region3: #{tpu_custom_call.1} parent=1 // pred_check_branch
      %9 = sbr.rel (0) target = $region5
    $region4: #{tpu_custom_call.1} parent=1 // pred_region
      _
    $region5: #{tpu_custom_call.1} parent=1 // pred_fallthru
      _
    // Predicated region
    $region6: #{tpu_custom_call.1} parent=1 // pred_check
      _
    $region7: #{tpu_custom_call.1} parent=1 // pred_check_branch
      %11 = sbr.rel (0) target = $region9
    $region8: #{tpu_custom_call.1} parent=1 // pred_region
      _
    $region9: #{tpu_custom_call.1} parent=1 // pred_fallthru
      _
    %p12 = scmp.eq.s32.totalorder 0, 0
    // Predicated region
    $region10: #{tpu_custom_call.1} parent=1 // pred_check
      %p13 = pneg %p12
    $region11: #{tpu_custom_call.1} parent=1 // pred_check_branch
      %15 = sbr.rel (%p13) target = $region13
    $region12: #{tpu_custom_call.1} parent=1 // pred_region
      %vm16 = vcmask 0
      %17 = vst.msk [vmem:[#allocation2] sm:$0x1] %vm16, 0.0
    $region13: #{tpu_custom_call.1} parent=1 // pred_fallthru
      _
    %v18 = vld [vmem:[%s0] sm:$0xff]
    %v19 = vld [vmem:[%s1] sm:$0xff]
    %vm20 = vcmask 261120
    %v21 = vsel %vm20, %v18, -inf
    %22 = vmax.xlane.f32.xlu0 %v21
    %v23 = vpop.xlane.xlu0 %22
    %v24 = vsub.f32 %v18, %v23
    %v25 = vmul.f32 %v24, 1.442695
    %v26 = vpow.pop %v25
    %v27 = vsel %vm20, %v26, 0.0
    %28 = vadd.xlane.f32.xlu0 %v27
    %v29 = vpop.xlane.xlu0 %28
    %v30 = vlog2.pop %v29
    %v31 = vmul.f32 %v30, 0.6931472
    %v32 = vlaneseq
    %v33 = vand.u32 %v32, 127
    %34 = vset.pattern.permute.xlu0 0
    %35 = vperm.xlu0 %34, %v19
    %v36 = vpop.permute.xlu0 %35
    %vm37 = vcmp.eq.s32.totalorder %v33, %v36
    %v38 = vsel %vm37, %v24, 0.0
    %v39 = vsel %vm20, %v38, 0.0
    %40 = vadd.xlane.f32.xlu0 %v39
    %v41 = vpop.xlane.xlu0 %40
    %v42 = vsel %vm20, %v24, 0.0
    %43 = vadd.xlane.f32.xlu0 %v42
    %v44 = vpop.xlane.xlu0 %43
    %v45 = vsub.f32 %v31, %v41
    %v46 = vmul.f32 %v45, 0.9
    %v47 = vmul.f32 %v31, 32.0
    %v48 = vsub.f32 %v47, %v44
    %v49 = vmul.f32 %v48, 0.003125
    %v50 = vadd.f32 %v46, %v49
    %s51 = smul.u32 0, 8
    %v52 = vlaneseq
    %v53 = vshrl.u32 %v52, 7
    %v54 = vstv %s51
    %v55 = vadd.s32 %v54, %v53
    %vm56 = vcmp.lt.s32.totalorder %v55, 8
    %v57 = vsel %vm56, %v50, 0.0
    %v58 = vld [vmem:[#allocation2] sm:$0x1]
    %vm59 = vcmask 7168
    %v60 = vsel %vm59, %v57, 0.0
    %61 = vadd.xlane.f32.xlu0 %v60
    %v62 = vpop.xlane.xlu0 %61
    %v63 = vrot.slane %v62, 4
    %v64 = vadd.f32 %v62, %v63
    %v65 = vrot.slane %v64, 2
    %v66 = vadd.f32 %v64, %v65
    %v67 = vrot.slane %v66, 1
    %v68 = vadd.f32 %v66, %v67
    %s69 = vtos %v68
    %v70 = vstv %s69
    %v71 = vadd.f32 %v58, %v70
    %vm72 = vcmask 0
    %73 = vst.msk [vmem:[#allocation2] sm:$0x1] %vm72, %v71
    // Predicated region
    $region14: #{tpu_custom_call.1} parent=1 // pred_check
      %p74 = pneg %p12
    $region15: #{tpu_custom_call.1} parent=1 // pred_check_branch
      %76 = sbr.rel (%p74) target = $region17
    $region16: #{tpu_custom_call.1} parent=1 // pred_region
      %v77 = vld [vmem:[#allocation2] sm:$0x1]
      %v78 = vrcp.pop 8.0
      %v79 = vmul.f32 %v77, %v78
      %80 = vst.msk [vmem:[#allocation3] sm:$0x1] %vm72, %v79
    $region17: #{tpu_custom_call.1} parent=1 // pred_fallthru
      _
    // Predicated region
    $region18: #{tpu_custom_call.1} parent=1 // pred_check
      _
    $region19: #{tpu_custom_call.1} parent=1 // pred_check_branch
      %82 = sbr.rel (0) target = $region21
    $region20: #{tpu_custom_call.1} parent=1 // pred_region
      %s84 = ssub.s32 16, 16
      %85 = vsyncadd [#allocation4], %s84
      %s87 = sshll.u32 [#allocation3], 4
      %s88 = int_to_ptr.vmem [resolvable:$true] %s87
      %90 = dma.vmem_to_hbm [thread:$0]  %s88, 16, %s2, [#allocation4]
    $region21: #{tpu_custom_call.1} parent=1 // pred_fallthru
      _
    // Predicated region
    $region22: #{tpu_custom_call.1} parent=1 // pred_check
      _
    $region23: #{tpu_custom_call.1} parent=1 // pred_check_branch
      %92 = sbr.rel (0) target = $region25
    $region24: #{tpu_custom_call.1} parent=1 // pred_region
      %93 = dma.done [#allocation4], 16
    $region25: #{tpu_custom_call.1} parent=1 // pred_fallthru
      _
    %94 = vsyncpa [#allocation4], 1

</llo_original>
